<compile_context>
chip_gen: v5e
topology: v5e:2x2
jax: 0.10.0
libtpu: 0.0.40
codegen_flags: <defaults>
</compile_context>

<pallas_src>
import functools

import jax
import jax.numpy as jnp
from jax.experimental import pallas as pl
from jax.experimental.pallas import tpu as pltpu


def _round_up(x, m):
    return ((x + m - 1) // m) * m


def _default_tile_b_cap():
    # v7x has 64 MiB VMEM per TensorCore (vs 128 MiB on v5e/v6e): halve the
    # batch tile there so double-buffered tiles + resident weights still fit.
    try:
        info = pltpu.get_tpu_info()
        vmem = getattr(info, "vmem_capacity_bytes", 64 << 20)
    except Exception:  # pragma: no cover - conservative fallback
        vmem = 64 << 20
    return 512 if vmem >= (96 << 20) else 256


# ----------------------------------------------------------------------------
# Pallas kernel: fused OpenClassifier forward on one lane-dense batch tile.
#   h      = sigmoid(x @ W1 + b1)        (f32 elementwise)
#   logits = h @ W2 + b2
# Feature dims are padded to multiples of 128, so every matmul operand and
# every store fills whole vregs. W2's zero-padded *rows* cancel the
# sigmoid(0)=0.5 garbage sitting in the padded hidden lanes, so the valid
# output lanes are exact.
# ----------------------------------------------------------------------------
def _open_classifier_kernel(x_ref, w1_ref, b1_ref, w2_ref, b2_ref, *out_refs):
    # bf16 x bf16 -> f32 accumulate on the MXU.
    z = jnp.dot(x_ref[...], w1_ref[...], preferred_element_type=jnp.float32)
    h = 1.0 / (1.0 + jnp.exp(-(z + b1_ref[...])))        # sigmoid in f32

    if len(out_refs) == 2:            # reverse=True: also emit the hidden acts
        h_ref, o_ref = out_refs
        h_ref[...] = h.astype(h_ref.dtype)
    else:
        (o_ref,) = out_refs

    o = jnp.dot(h.astype(w2_ref.dtype), w2_ref[...],
                preferred_element_type=jnp.float32)
    o_ref[...] = (o + b2_ref[...]).astype(o_ref.dtype)


def open_classifier_forward(x, w1, b1, w2, b2, *, return_hidden,
                            d_hidden, d_out, tile_b_cap):
    """x: [B, d_in] f32.  w1: [D_in_p, H_p] bf16, b1: [1, H_p] f32,
    w2: [H_p, D_out_p] bf16, b2: [1, D_out_p] f32 (already padded/cast)."""
    B, d_in = x.shape
    D_in_p, H_p = w1.shape
    _, D_out_p = w2.shape

    # Batch tiling: multiple grid steps -> BlockSpec double-buffering engages
    # and the "parallel" axis can be sharded across v7x's two TensorCores.
    tile_b = min(int(tile_b_cap), _round_up(max(B, 1), 8))
    B_pad = _round_up(B, tile_b)
    grid = (B_pad // tile_b,)

    # Lane-dense bf16 input tile (pad + cast fuse under jit).
    xp = jnp.pad(x, ((0, B_pad - B), (0, D_in_p - d_in))).astype(jnp.bfloat16)

    # NOTE: weight/bias index_maps are constant, so Pallas only DMAs them once.
    # TODO(synk): for large hidden dims (e.g. 4096x4096) add a K-reduction grid
    # axis / pl.Buffered(1) so the resident weights are not double-buffered.
    in_specs = [
        pl.BlockSpec((tile_b, D_in_p), lambda i: (i, 0)),
        pl.BlockSpec((D_in_p, H_p), lambda i: (0, 0)),
        pl.BlockSpec((1, H_p), lambda i: (0, 0)),
        pl.BlockSpec((H_p, D_out_p), lambda i: (0, 0)),
        pl.BlockSpec((1, D_out_p), lambda i: (0, 0)),
    ]

    o_shape = jax.ShapeDtypeStruct((B_pad, D_out_p), jnp.float32)
    o_spec = pl.BlockSpec((tile_b, D_out_p), lambda i: (i, 0))
    if return_hidden:
        out_shape = (jax.ShapeDtypeStruct((B_pad, H_p), jnp.float32), o_shape)
        out_specs = (pl.BlockSpec((tile_b, H_p), lambda i: (i, 0)), o_spec)
    else:
        out_shape = o_shape
        out_specs = o_spec

    # VMEM budget: double-buffered x/out tiles + resident (2x-buffered) weights
    # + f32 intermediates, plus headroom; capped so it fits v7x's 64 MiB VMEM.
    x_bytes = tile_b * D_in_p * 2
    w_bytes = (D_in_p * H_p + H_p * D_out_p) * 2 + (H_p + D_out_p) * 4
    o_bytes = tile_b * D_out_p * 4 + (tile_b * H_p * 4 if return_hidden else 0)
    interm = tile_b * (H_p + D_out_p) * 4
    vmem_limit = 2 * (x_bytes + w_bytes + o_bytes) + interm + (8 << 20)
    vmem_limit = int(min(max(vmem_limit, 16 << 20), 48 << 20))

    cost = pl.CostEstimate(
        flops=int(2 * B_pad * D_in_p * H_p + 2 * B_pad * H_p * D_out_p),
        transcendentals=int(B_pad * H_p),             # one exp per sigmoid
        bytes_accessed=int(B_pad * D_in_p * 2 + w_bytes + B_pad * D_out_p * 4
                           + (B_pad * H_p * 4 if return_hidden else 0)),
    )

    outs = pl.pallas_call(
        _open_classifier_kernel,
        out_shape=out_shape,
        grid_spec=pltpu.PrefetchScalarGridSpec(
            num_scalar_prefetch=0,
            grid=grid,
            in_specs=in_specs,
            out_specs=out_specs,
        ),
        compiler_params=pltpu.CompilerParams(
            dimension_semantics=("parallel",),
            vmem_limit_bytes=vmem_limit,
        ),
        cost_estimate=cost,
    )(xp, w1, b1, w2, b2)

    if return_hidden:
        h_p, o_p = outs
        return h_p[:B, :d_hidden], o_p[:B, :d_out]
    return outs[:B, :d_out]


# ----------------------------------------------------------------------------
# Gradient reversal (identity forward, -coeff * grad backward).  Provided for
# parity with GradientReverseLayer; OpenClassifier.forward never applies it.
# ----------------------------------------------------------------------------
@jax.custom_vjp
def grad_reverse(x, coeff=1.0):
    return x


def _gr_fwd(x, coeff):
    return x, coeff


def _gr_bwd(coeff, g):
    return (-coeff * g, None)


grad_reverse.defvjp(_gr_fwd, _gr_bwd)


# ----------------------------------------------------------------------------
class PallasOpenClassifier:
    """JAX/Pallas equivalent of the PyTorch OpenClassifier module."""

    def __init__(self, dims, key, finally_activate=None, lambd=1.0,
                 tile_b_cap=None):
        assert len(dims) == 3
        self.dims = tuple(dims)
        self.lambd = lambd
        self.finally_activate = finally_activate  # unused by reference forward

        d_in, d_hidden, d_out = dims
        # torch.nn.Linear-style init: U(-1/sqrt(fan_in), 1/sqrt(fan_in)).
        key, k1w, k1b, k2w, k2b = jax.random.split(key, 5)
        bnd1 = 1.0 / float(d_in) ** 0.5
        bnd2 = 1.0 / float(d_hidden) ** 0.5
        # f32 master copies in [in, out] layout (also used for reference check).
        self.w1_t = jax.random.uniform(k1w, (d_in, d_hidden), jnp.float32,
                                       -bnd1, bnd1)
        self.b1 = jax.random.uniform(k1b, (d_hidden,), jnp.float32, -bnd1, bnd1)
        self.w2_t = jax.random.uniform(k2w, (d_hidden, d_out), jnp.float32,
                                       -bnd2, bnd2)
        self.b2 = jax.random.uniform(k2b, (d_out,), jnp.float32, -bnd2, bnd2)

        # Pad once to lane-dense (multiples of 128) and cast the MXU operands
        # to bf16 once here (not per forward call / per layer in-kernel).
        D_in_p, H_p, D_out_p = (_round_up(d, 128) for d in dims)
        self._w1 = jnp.pad(self.w1_t,
                           ((0, D_in_p - d_in), (0, H_p - d_hidden))
                           ).astype(jnp.bfloat16)
        self._b1 = jnp.pad(self.b1.reshape(1, -1), ((0, 0), (0, H_p - d_hidden)))
        self._w2 = jnp.pad(self.w2_t,
                           ((0, H_p - d_hidden), (0, D_out_p - d_out))
                           ).astype(jnp.bfloat16)
        self._b2 = jnp.pad(self.b2.reshape(1, -1), ((0, 0), (0, D_out_p - d_out)))

        if tile_b_cap is None:
            tile_b_cap = _default_tile_b_cap()

        def _fwd(x, w1, b1, w2, b2, return_hidden):
            return open_classifier_forward(
                x, w1, b1, w2, b2, return_hidden=return_hidden,
                d_hidden=d_hidden, d_out=d_out, tile_b_cap=tile_b_cap)

        self._fwd = jax.jit(_fwd, static_argnames=("return_hidden",))

    def __call__(self, x, reverse=False):
        if reverse:
            h, logits = self._fwd(x, self._w1, self._b1, self._w2, self._b2,
                                  return_hidden=True)
            return h, logits
        return self._fwd(x, self._w1, self._b1, self._w2, self._b2,
                         return_hidden=False)


# ----------------------------------------------------------------------------
if __name__ == "__main__":
    key = jax.random.PRNGKey(0)
    key, kx = jax.random.split(key)

    dims = [32, 64, 16]          # input_dim, hidden_dim, num_classes
    B = 8
    x = jax.random.normal(kx, (B, dims[0]), jnp.float32)

    clf = PallasOpenClassifier(dims, key, lambd=1.0)

    logits = jax.block_until_ready(clf(x, reverse=False))
    h_rev, logits_rev = clf(x, reverse=True)
    jax.block_until_ready((h_rev, logits_rev))

    # Plain-JAX f32 reference (kernel uses bf16 MXU operands -> loose tol).
    h_ref = jax.nn.sigmoid(x @ clf.w1_t + clf.b1)
    o_ref = h_ref @ clf.w2_t + clf.b2

    assert logits.shape == (B, dims[2])
    assert h_rev.shape == (B, dims[1]) and logits_rev.shape == (B, dims[2])
    assert jnp.allclose(logits, o_ref, atol=2e-2, rtol=2e-2)
    assert jnp.allclose(logits_rev, o_ref, atol=2e-2, rtol=2e-2)
    assert jnp.allclose(h_rev, h_ref, atol=2e-2, rtol=2e-2)

    print("KERNEL_OK")
</pallas_src>

<mosaic_0001>
module attributes {stable_mosaic.version = 11 : i64} {
  func.func @_open_classifier_kernel(%arg0: i32, %arg1: memref<8x128xbf16, #tpu.memory_space<vmem>>, %arg2: memref<128x128xbf16, #tpu.memory_space<vmem>>, %arg3: memref<1x128xf32, #tpu.memory_space<vmem>>, %arg4: memref<128x128xbf16, #tpu.memory_space<vmem>>, %arg5: memref<1x128xf32, #tpu.memory_space<vmem>>, %arg6: memref<8x128xf32, #tpu.memory_space<vmem>>) attributes {dimension_semantics = [#tpu.dimension_semantics<parallel>], iteration_bounds = array<i64: 1>, scalar_prefetch = 0 : i64, scratch_operands = 0 : i64, tpu.core_type = #tpu.core_type<tc>, window_params = [{transform_indices = @transform_0, window_bounds = array<i64: 8, 128>}, {pipeline_mode = #tpu.pipeline_mode<synchronous>, transform_indices = @transform_1, window_bounds = array<i64: 128, 128>}, {pipeline_mode = #tpu.pipeline_mode<synchronous>, transform_indices = @transform_2, window_bounds = array<i64: 1, 128>}, {pipeline_mode = #tpu.pipeline_mode<synchronous>, transform_indices = @transform_3, window_bounds = array<i64: 128, 128>}, {pipeline_mode = #tpu.pipeline_mode<synchronous>, transform_indices = @transform_4, window_bounds = array<i64: 1, 128>}, {transform_indices = @transform_5, window_bounds = array<i64: 8, 128>}]} {
    %c0 = arith.constant 0 : index
    %c0_0 = arith.constant 0 : index
    %0 = vector.load %arg1[%c0, %c0_0] : memref<8x128xbf16, #tpu.memory_space<vmem>>, vector<8x128xbf16>
    %c0_1 = arith.constant 0 : index
    %c0_2 = arith.constant 0 : index
    %1 = vector.load %arg2[%c0_1, %c0_2] : memref<128x128xbf16, #tpu.memory_space<vmem>>, vector<128x128xbf16>
    %cst = arith.constant dense<0.000000e+00> : vector<8x128xf32>
    %2 = tpu.matmul %0, %1, %cst {dimension_numbers = #tpu.dot_dimension_numbers<[1], [0], [0], [1], [0, 0, 1, 1], [], []>} : vector<8x128xbf16>, vector<128x128xbf16>, vector<8x128xf32> -> vector<8x128xf32>
    %c0_3 = arith.constant 0 : index
    %c0_4 = arith.constant 0 : index
    %3 = vector.load %arg3[%c0_3, %c0_4] : memref<1x128xf32, #tpu.memory_space<vmem>>, vector<1x128xf32>
    %4 = vector.broadcast %3 : vector<1x128xf32> to vector<8x128xf32>
    %5 = arith.addf %2, %4 : vector<8x128xf32>
    %cst_5 = arith.constant 0.000000e+00 : f32
    %6 = vector.broadcast %cst_5 : f32 to vector<8x128xf32>
    %7 = arith.subf %6, %5 : vector<8x128xf32>
    %8 = math.exp %7 : vector<8x128xf32>
    %cst_6 = arith.constant 1.000000e+00 : f32
    %9 = vector.broadcast %cst_6 : f32 to vector<8x128xf32>
    %10 = arith.addf %9, %8 : vector<8x128xf32>
    %cst_7 = arith.constant 1.000000e+00 : f32
    %11 = vector.broadcast %cst_7 : f32 to vector<8x128xf32>
    %12 = arith.divf %11, %10 : vector<8x128xf32>
    %13 = arith.truncf %12 : vector<8x128xf32> to vector<8x128xbf16>
    %c0_8 = arith.constant 0 : index
    %c0_9 = arith.constant 0 : index
    %14 = vector.load %arg4[%c0_8, %c0_9] : memref<128x128xbf16, #tpu.memory_space<vmem>>, vector<128x128xbf16>
    %cst_10 = arith.constant dense<0.000000e+00> : vector<8x128xf32>
    %15 = tpu.matmul %13, %14, %cst_10 {dimension_numbers = #tpu.dot_dimension_numbers<[1], [0], [0], [1], [0, 0, 1, 1], [], []>} : vector<8x128xbf16>, vector<128x128xbf16>, vector<8x128xf32> -> vector<8x128xf32>
    %c0_11 = arith.constant 0 : index
    %c0_12 = arith.constant 0 : index
    %16 = vector.load %arg5[%c0_11, %c0_12] : memref<1x128xf32, #tpu.memory_space<vmem>>, vector<1x128xf32>
    %17 = vector.broadcast %16 : vector<1x128xf32> to vector<8x128xf32>
    %18 = arith.addf %15, %17 : vector<8x128xf32>
    %c0_13 = arith.constant 0 : index
    %c0_14 = arith.constant 0 : index
    %19 = vector.load %arg6[%c0_13, %c0_14] : memref<8x128xf32, #tpu.memory_space<vmem>>, vector<8x128xf32>
    tpu.vector_store %arg6[%c0_13, %c0_14], %18 {strides = array<i32>} : memref<8x128xf32, #tpu.memory_space<vmem>>, vector<8x128xf32>,
    return
  }
  func.func @transform_0(%arg0: i32) -> (i32, i32) {
    %c0_i32 = arith.constant 0 : i32
    %c0_i32_0 = arith.constant 0 : i32
    return %arg0, %c0_i32 : i32, i32
  }
  func.func @transform_1(%arg0: i32) -> (i32, i32) {
    %c0_i32 = arith.constant 0 : i32
    %c0_i32_0 = arith.constant 0 : i32
    %c0_i32_1 = arith.constant 0 : i32
    return %c0_i32, %c0_i32_0 : i32, i32
  }
  func.func @transform_2(%arg0: i32) -> (i32, i32) {
    %c0_i32 = arith.constant 0 : i32
    %c0_i32_0 = arith.constant 0 : i32
    %c0_i32_1 = arith.constant 0 : i32
    return %c0_i32, %c0_i32_0 : i32, i32
  }
  func.func @transform_3(%arg0: i32) -> (i32, i32) {
    %c0_i32 = arith.constant 0 : i32
    %c0_i32_0 = arith.constant 0 : i32
    %c0_i32_1 = arith.constant 0 : i32
    return %c0_i32, %c0_i32_0 : i32, i32
  }
  func.func @transform_4(%arg0: i32) -> (i32, i32) {
    %c0_i32 = arith.constant 0 : i32
    %c0_i32_0 = arith.constant 0 : i32
    %c0_i32_1 = arith.constant 0 : i32
    return %c0_i32, %c0_i32_0 : i32, i32
  }
  func.func @transform_5(%arg0: i32) -> (i32, i32) {
    %c0_i32 = arith.constant 0 : i32
    %c0_i32_0 = arith.constant 0 : i32
    return %arg0, %c0_i32 : i32, i32
  }
}

</mosaic_0001>

<llo_original>
// kernel: _fwd.1
$region0: #{_fwd.1}
  #allocation0 [shape = 'u32[]', space=smem, size = 0x4, offset = 0x4, fixed_abs, tag = 'smem constant byte address 0x4 - core index']
  #allocation1 [shape = 'u32[72,128]{1,0:T(1,128)}', space=vmem, size = 0x9000, scoped, tag = 'internal scratch']
  %s0 = inlined_call_operand.vmem [shape: bf16[8,128], index: 0, kind: input, shape index: {}]
  %s1 = inlined_call_operand.hbm [shape: bf16[128,128], index: 1, kind: input, shape index: {}]
  %s2 = inlined_call_operand.vmem [shape: f32[1,128], index: 2, kind: input, shape index: {}]
  %s3 = inlined_call_operand.hbm [shape: bf16[128,128], index: 3, kind: input, shape index: {}]
  %s4 = inlined_call_operand.vmem [shape: f32[1,128], index: 4, kind: input, shape index: {}]
  %s5 = inlined_call_operand.hbm [shape: f32[8,128], index: 5, kind: output, shape index: {}]
  %s6 = sld [smem:[#allocation0]]
  $region38: #{_fwd.1} parent=0
    _
  %s8 = ssub.s32 1, %s6
  %s9 = scalar_select 0, %s8, %s6
  $region1: #{_fwd.1} parent=0
    #allocation2 [shape = 'u8[32768]{0}', space=vmem, size = 0x8000, scoped, tag = 'input window, operand 1, single buffered']
    #allocation3 [shape = 's32[1]{0}', space=sflag, size = 0x4, scoped, tag = 'scoped memory for _fwd.1']
    #allocation4 [shape = 's32[1]{0}', space=sflag, size = 0x4, scoped, tag = 'scoped memory for _fwd.1']
    #allocation5 [shape = 'u8[32768]{0}', space=vmem, size = 0x8000, scoped, tag = 'input window, operand 3, single buffered']
    #allocation6 [shape = 's32[1]{0}', space=sflag, size = 0x4, scoped, tag = 'scoped memory for _fwd.1']
    #allocation7 [shape = 'u8[4096]{0}', space=vmem, size = 0x1000, scoped, tag = 'output window, operand 0, single buffered']
    %10 = vsyncpa [#allocation3], 0
    %11 = vsyncpa [#allocation6], 0
    %12 = vsyncpa [#allocation4], 0
    // Predicated region
    $region2: #{_fwd.1} parent=1 // pred_check
      _
    $region3: #{_fwd.1} parent=1 // pred_check_branch
      %14 = sbr.rel (0) target = $region5
    $region4: #{_fwd.1} parent=1 // pred_region
      _
    $region5: #{_fwd.1} parent=1 // pred_fallthru
      _
    // Predicated region
    $region6: #{_fwd.1} parent=1 // pred_check
      _
    $region7: #{_fwd.1} parent=1 // pred_check_branch
      %16 = sbr.rel (0) target = $region9
    $region8: #{_fwd.1} parent=1 // pred_region
      %18 = vsyncadd [#allocation3], 0
      %s19 = sshll.u32 %s1, 4
      %s20 = int_to_ptr.hbm [resolvable:$true] %s19
      %s21 = sshll.u32 [#allocation2], 4
      %s22 = int_to_ptr.vmem [resolvable:$true] %s21
      %27 = dma.hbm_to_vmem [thread:$0]  %s20, 1024, %s22, [#allocation3], 64, 64, 4
    $region9: #{_fwd.1} parent=1 // pred_fallthru
      _
    // Predicated region
    $region10: #{_fwd.1} parent=1 // pred_check
      _
    $region11: #{_fwd.1} parent=1 // pred_check_branch
      %29 = sbr.rel (0) target = $region13
    $region12: #{_fwd.1} parent=1 // pred_region
      _
    $region13: #{_fwd.1} parent=1 // pred_fallthru
      _
    // Predicated region
    $region14: #{_fwd.1} parent=1 // pred_check
      _
    $region15: #{_fwd.1} parent=1 // pred_check_branch
      %31 = sbr.rel (0) target = $region17
    $region16: #{_fwd.1} parent=1 // pred_region
      %33 = vsyncadd [#allocation6], 0
      %s34 = sshll.u32 %s3, 4
      %s35 = int_to_ptr.hbm [resolvable:$true] %s34
      %s36 = sshll.u32 [#allocation5], 4
      %s37 = int_to_ptr.vmem [resolvable:$true] %s36
      %42 = dma.hbm_to_vmem [thread:$0]  %s35, 1024, %s37, [#allocation6], 64, 64, 4
    $region17: #{_fwd.1} parent=1 // pred_fallthru
      _
    // Predicated region
    $region18: #{_fwd.1} parent=1 // pred_check
      _
    $region19: #{_fwd.1} parent=1 // pred_check_branch
      %44 = sbr.rel (0) target = $region21
    $region20: #{_fwd.1} parent=1 // pred_region
      _
    $region21: #{_fwd.1} parent=1 // pred_fallthru
      _
    // Predicated region
    $region22: #{_fwd.1} parent=1 // pred_check
      _
    $region23: #{_fwd.1} parent=1 // pred_check_branch
      %46 = sbr.rel (0) target = $region25
    $region24: #{_fwd.1} parent=1 // pred_region
      %48 = dma.done [#allocation3], 1024
    $region25: #{_fwd.1} parent=1 // pred_fallthru
      _
    // Predicated region
    $region26: #{_fwd.1} parent=1 // pred_check
      _
    $region27: #{_fwd.1} parent=1 // pred_check_branch
      %50 = sbr.rel (0) target = $region29
    $region28: #{_fwd.1} parent=1 // pred_region
      %52 = dma.done [#allocation6], 1024
    $region29: #{_fwd.1} parent=1 // pred_fallthru
      _
    %v53 = vld [vmem:[%s0] sm:$0xf]
    %v54 = vld [vmem:[#allocation2] sm:$0xf]
    %v55 = vld [vmem:[#allocation2 + $0x4] sm:$0xf]
    %v56 = vld [vmem:[#allocation2 + $0x8] sm:$0xf]
    %v57 = vld [vmem:[#allocation2 + $0xc] sm:$0xf]
    %v58 = vld [vmem:[#allocation2 + $0x10] sm:$0xf]
    %v59 = vld [vmem:[#allocation2 + $0x14] sm:$0xf]
    %v60 = vld [vmem:[#allocation2 + $0x18] sm:$0xf]
    %v61 = vld [vmem:[#allocation2 + $0x1c] sm:$0xf]
    %v62 = vld [vmem:[#allocation2 + $0x20] sm:$0xf]
    %v63 = vld [vmem:[#allocation2 + $0x24] sm:$0xf]
    %v64 = vld [vmem:[#allocation2 + $0x28] sm:$0xf]
    %v65 = vld [vmem:[#allocation2 + $0x2c] sm:$0xf]
    %v66 = vld [vmem:[#allocation2 + $0x30] sm:$0xf]
    %v67 = vld [vmem:[#allocation2 + $0x34] sm:$0xf]
    %v68 = vld [vmem:[#allocation2 + $0x38] sm:$0xf]
    %v69 = vld [vmem:[#allocation2 + $0x3c] sm:$0xf]
    %v70 = vld [vmem:[%s2] sm:$0x1]
    %v72 = vperm.slane %v70, 0
    %v90 = vunpack.c.l.b16 %v54
    %v91 = vunpack.c.l.b16 %v55
    %v92 = vunpack.c.l.b16 %v56
    %v93 = vunpack.c.l.b16 %v57
    %v94 = vunpack.c.l.b16 %v58
    %v95 = vunpack.c.l.b16 %v59
    %v96 = vunpack.c.l.b16 %v60
    %v97 = vunpack.c.l.b16 %v61
    %v98 = vunpack.c.l.b16 %v62
    %v99 = vunpack.c.l.b16 %v63
    %v100 = vunpack.c.l.b16 %v64
    %v101 = vunpack.c.l.b16 %v65
    %v102 = vunpack.c.l.b16 %v66
    %v103 = vunpack.c.l.b16 %v67
    %v104 = vunpack.c.l.b16 %v68
    %v105 = vunpack.c.l.b16 %v69
    %v106 = vpack.c.b16 %v91, %v90
    %v107 = vpack.c.b16 %v93, %v92
    %v108 = vpack.c.b16 %v95, %v94
    %v109 = vpack.c.b16 %v97, %v96
    %v110 = vpack.c.b16 %v99, %v98
    %v111 = vpack.c.b16 %v101, %v100
    %v112 = vpack.c.b16 %v103, %v102
    %v113 = vpack.c.b16 %v105, %v104
    %122 = vmatpush.bf16.msra.mxu0 %v113
    %123 = vmatpush.bf16.msra.mxu0 %v112
    %124 = vmatpush.bf16.msra.mxu0 %v111
    %125 = vmatpush.bf16.msra.mxu0 %v110
    %126 = vmatpush.bf16.msra.mxu0 %v109
    %127 = vmatpush.bf16.msra.mxu0 %v108
    %128 = vmatpush.bf16.msra.mxu0 %v107
    %129 = vmatpush.bf16.msra.mxu0 %v106
    %130 = vmatmul.bf16.gmra.mxu0 %v53
    %v131 = vpop.f32.mrf.mxu0
    %v132 = vadd.f32 %v72, %v131
    %v133 = vpop.f32.mrf.mxu0
    %134 = vdwg.mxu0
    %v135 = vsub.f32 0.0, %v132
    %v136 = vmul.f32 %v135, 1.442695
    %v137 = vpow.pop %v136
    %v138 = vadd.f32 %v137, 1.0
    %v139 = vrcp.pop %v138
    %v140 = vmul.f32 %v138, %v139
    %v141 = vsub.f32 1.0, %v140
    %v142 = vmul.f32 %v139, %v141
    %v143 = vadd.f32 %v139, %v142
    %vm144 = vweird.f32 %v138
    %vm145 = vweird.f32 %v139
    %vm146 = vmor %vm144, %vm145
    %v147 = vsel %vm146, %v139, %v143
    %v148 = vand.u32 2147483647, %v138
    %vm149 = vcmp.eq.f32.partialorder %v148, 8.507059e+37
    %v150 = vand.u32 %v138, 2147483648
    %v151 = vor.u32 1.1754944e-38, %v150
    %v152 = vsel %vm149, %v151, %v147
    %v153 = vmul.f32 1.0, %v152
    %v154 = vpack.c.bf16 %v153, %v153
    %v155 = vld [vmem:[#allocation5] sm:$0xf]
    %v156 = vld [vmem:[#allocation5 + $0x4] sm:$0xf]
    %v157 = vld [vmem:[#allocation5 + $0x8] sm:$0xf]
    %v158 = vld [vmem:[#allocation5 + $0xc] sm:$0xf]
    %v159 = vld [vmem:[#allocation5 + $0x10] sm:$0xf]
    %v160 = vld [vmem:[#allocation5 + $0x14] sm:$0xf]
    %v161 = vld [vmem:[#allocation5 + $0x18] sm:$0xf]
    %v162 = vld [vmem:[#allocation5 + $0x1c] sm:$0xf]
    %v163 = vld [vmem:[#allocation5 + $0x20] sm:$0xf]
    %v164 = vld [vmem:[#allocation5 + $0x24] sm:$0xf]
    %v165 = vld [vmem:[#allocation5 + $0x28] sm:$0xf]
    %v166 = vld [vmem:[#allocation5 + $0x2c] sm:$0xf]
    %v167 = vld [vmem:[#allocation5 + $0x30] sm:$0xf]
    %v168 = vld [vmem:[#allocation5 + $0x34] sm:$0xf]
    %v169 = vld [vmem:[#allocation5 + $0x38] sm:$0xf]
    %v170 = vld [vmem:[#allocation5 + $0x3c] sm:$0xf]
    %v171 = vld [vmem:[%s4] sm:$0x1]
    %v173 = vperm.slane %v171, 0
    %v191 = vunpack.c.l.b16 %v155
    %v192 = vunpack.c.l.b16 %v156
    %v193 = vunpack.c.l.b16 %v157
    %v194 = vunpack.c.l.b16 %v158
    %v195 = vunpack.c.l.b16 %v159
    %v196 = vunpack.c.l.b16 %v160
    %v197 = vunpack.c.l.b16 %v161
    %v198 = vunpack.c.l.b16 %v162
    %v199 = vunpack.c.l.b16 %v163
    %v200 = vunpack.c.l.b16 %v164
    %v201 = vunpack.c.l.b16 %v165
    %v202 = vunpack.c.l.b16 %v166
    %v203 = vunpack.c.l.b16 %v167
    %v204 = vunpack.c.l.b16 %v168
    %v205 = vunpack.c.l.b16 %v169
    %v206 = vunpack.c.l.b16 %v170
    %v207 = vpack.c.b16 %v192, %v191
    %v208 = vpack.c.b16 %v194, %v193
    %v209 = vpack.c.b16 %v196, %v195
    %v210 = vpack.c.b16 %v198, %v197
    %v211 = vpack.c.b16 %v200, %v199
    %v212 = vpack.c.b16 %v202, %v201
    %v213 = vpack.c.b16 %v204, %v203
    %v214 = vpack.c.b16 %v206, %v205
    %223 = vmatpush.bf16.msra.mxu0 %v214
    %224 = vmatpush.bf16.msra.mxu0 %v213
    %225 = vmatpush.bf16.msra.mxu0 %v212
    %226 = vmatpush.bf16.msra.mxu0 %v211
    %227 = vmatpush.bf16.msra.mxu0 %v210
    %228 = vmatpush.bf16.msra.mxu0 %v209
    %229 = vmatpush.bf16.msra.mxu0 %v208
    %230 = vmatpush.bf16.msra.mxu0 %v207
    %231 = vmatmul.bf16.gmra.mxu0 %v154
    %v232 = vpop.f32.mrf.mxu0
    %v233 = vadd.f32 %v173, %v232
    %v234 = vpop.f32.mrf.mxu0
    %235 = vdwg.mxu0
    %236 = vst [vmem:[#allocation7] sm:$0xff] %v233
    // Predicated region
    $region30: #{_fwd.1} parent=1 // pred_check
      _
    $region31: #{_fwd.1} parent=1 // pred_check_branch
      %238 = sbr.rel (0) target = $region33
    $region32: #{_fwd.1} parent=1 // pred_region
      %240 = vsyncadd [#allocation4], 0
      %s242 = sshll.u32 [#allocation7], 4
      %s243 = int_to_ptr.vmem [resolvable:$true] %s242
      %s244 = sshll.u32 %s5, 4
      %s245 = int_to_ptr.hbm [resolvable:$true] %s244
      %247 = dma.vmem_to_hbm [thread:$0]  %s243, 128, %s245, [#allocation4]
    $region33: #{_fwd.1} parent=1 // pred_fallthru
      _
    // Predicated region
    $region34: #{_fwd.1} parent=1 // pred_check
      _
    $region35: #{_fwd.1} parent=1 // pred_check_branch
      %249 = sbr.rel (0) target = $region37
    $region36: #{_fwd.1} parent=1 // pred_region
      %251 = dma.done [#allocation4], 128
    $region37: #{_fwd.1} parent=1 // pred_fallthru
      _
    %252 = vsyncpa [#allocation3], 1
    %253 = vsyncpa [#allocation6], 1
    %254 = vsyncpa [#allocation4], 1

</llo_original>
